<compile_context>
chip_gen: v7x
topology: tpu7x:2x2x1
jax: 0.10.0
libtpu: 0.0.40
codegen_flags: <defaults>
</compile_context>

<pallas_src>
import functools

import jax
import jax.numpy as jnp
from jax import lax
from jax.experimental import pallas as pl
from jax.experimental.pallas import tpu as pltpu

_VMEM_LIMIT = 32 * 1024 * 1024  # explicit scoped-VMEM budget (safe on v5e/v6e/v7x)


# --------------------------------------------------------------------------- #
# helpers
# --------------------------------------------------------------------------- #
def _pick_tile(dim, target, align):
    """Largest tile <= target that divides `dim` and is a multiple of `align`.
    Falls back to the full dim (full-extent blocks always satisfy layout rules)."""
    if dim <= target:
        return dim
    for t in range(target, 0, -1):
        if dim % t == 0 and t % align == 0:
            return t
    return dim


# --------------------------------------------------------------------------- #
# tiled linear projection:  y = x @ w.T   (PyTorch nn.Linear, bias=False)
# --------------------------------------------------------------------------- #
def linear_kernel_acc(x_ref, w_ref, o_ref, acc_ref):
    # bf16 output path: accumulate in an f32 VMEM scratch, cast at the end.
    @pl.when(pl.program_id(2) == 0)
    def _init():
        acc_ref[...] = jnp.zeros(acc_ref.shape, acc_ref.dtype)

    acc_ref[...] += lax.dot_general(
        x_ref[...], w_ref[...],
        dimension_numbers=(((1,), (1,)), ((), ())),   # contract K with K
        preferred_element_type=jnp.float32,
    )

    @pl.when(pl.program_id(2) == pl.num_programs(2) - 1)
    def _finalize():
        o_ref[...] = acc_ref[...].astype(o_ref.dtype)


def linear_kernel_direct(x_ref, w_ref, o_ref):
    # f32 output path: accumulate directly into the resident output block.
    @pl.when(pl.program_id(2) == 0)
    def _init():
        o_ref[...] = jnp.zeros(o_ref.shape, o_ref.dtype)

    o_ref[...] += lax.dot_general(
        x_ref[...], w_ref[...],
        dimension_numbers=(((1,), (1,)), ((), ())),
        preferred_element_type=jnp.float32,
    )


def pallas_linear(x2d, w, *, out_dtype=None,
                  tm_target=512, tn_target=512, tk_target=512):
    """y = x2d @ w.T.  x2d: (M, K), w: (N, K) in PyTorch Linear layout."""
    M, K = x2d.shape
    N, K2 = w.shape
    assert K == K2
    if out_dtype is None:
        out_dtype = x2d.dtype

    sub_align = 16 if x2d.dtype == jnp.bfloat16 else 8
    tm = _pick_tile(M, tm_target, sub_align)
    tn = _pick_tile(N, tn_target, 128)   # tn is the lane dim of the output block
    tk = _pick_tile(K, tk_target, 128)   # tk is the lane dim of both input blocks

    if out_dtype == jnp.float32:
        kernel = linear_kernel_direct
        scratch = []
    else:
        kernel = linear_kernel_acc
        scratch = [pltpu.VMEM((tm, tn), jnp.float32)]

    grid = (M // tm, N // tn, K // tk)
    return pl.pallas_call(
        kernel,
        out_shape=jax.ShapeDtypeStruct((M, N), out_dtype),
        grid_spec=pltpu.PrefetchScalarGridSpec(
            num_scalar_prefetch=0,
            grid=grid,
            in_specs=[
                pl.BlockSpec((tm, tk), lambda i, j, k: (i, k)),
                pl.BlockSpec((tn, tk), lambda i, j, k: (j, k)),
            ],
            out_specs=pl.BlockSpec((tm, tn), lambda i, j, k: (i, j)),
            scratch_shapes=scratch,
        ),
        compiler_params=pltpu.CompilerParams(
            dimension_semantics=("parallel", "parallel", "arbitrary"),
            vmem_limit_bytes=_VMEM_LIMIT,
        ),
    )(x2d, w)


# --------------------------------------------------------------------------- #
# flash attention core
# --------------------------------------------------------------------------- #
def flash_attn_kernel(q_ref, k_ref, v_ref, o_ref, m_sc, l_sc, acc_sc,
                      *, heads, dim_head):
    # q_ref: (tq, H*Dh)   k_ref/v_ref: (tkv, H*Dh)   o_ref: (tq, H*Dh)
    # m_sc/l_sc: (tq, H) f32 running max / sum, acc_sc: (tq, H*Dh) f32.
    # q already carries the softmax scale (folded into the qkv weight).
    ki = pl.program_id(2)

    @pl.when(ki == 0)
    def _init():
        m_sc[...] = jnp.full(m_sc.shape, -jnp.inf, dtype=m_sc.dtype)
        l_sc[...] = jnp.zeros(l_sc.shape, l_sc.dtype)
        acc_sc[...] = jnp.zeros(acc_sc.shape, acc_sc.dtype)

    q = q_ref[...]            # bf16, lane-dense
    k = k_ref[...]
    v = v_ref[...]

    for h in range(heads):    # unrolled: H independent (tq,Dh)x(Dh,tkv) matmuls
        sl = slice(h * dim_head, (h + 1) * dim_head)
        q_h = q[:, sl]
        k_h = k[:, sl]
        v_h = v[:, sl]

        # scores (tq, tkv) in f32 on the MXU
        s = lax.dot_general(
            q_h, k_h,
            dimension_numbers=(((1,), (1,)), ((), ())),
            preferred_element_type=jnp.float32)

        m_prev = m_sc[:, h:h + 1]                                 # (tq, 1)
        m_new = jnp.maximum(m_prev, jnp.max(s, axis=-1, keepdims=True))
        alpha = jnp.exp(m_prev - m_new)
        p = jnp.exp(s - m_new)                                    # (tq, tkv)

        l_sc[:, h:h + 1] = alpha * l_sc[:, h:h + 1] + jnp.sum(
            p, axis=-1, keepdims=True)
        acc_sc[:, sl] = alpha * acc_sc[:, sl] + lax.dot_general(
            p.astype(v_h.dtype), v_h,
            dimension_numbers=(((1,), (0,)), ((), ())),
            preferred_element_type=jnp.float32)
        m_sc[:, h:h + 1] = m_new

    @pl.when(ki == pl.num_programs(2) - 1)
    def _finalize():
        pieces = []
        for h in range(heads):
            sl = slice(h * dim_head, (h + 1) * dim_head)
            inv_l = pl.reciprocal(l_sc[:, h:h + 1], approx=False)
            pieces.append(acc_sc[:, sl] * inv_l)
        # single lane-dense store of width H*Dh == 'b h n d -> b n (h d)'
        o_ref[...] = jnp.concatenate(pieces, axis=-1).astype(o_ref.dtype)


def pallas_flash_attention(qkv3, *, heads, dim_head,
                           tq_target=512, tkv_target=512):
    """qkv3: (B, N, 3*H*Dh) projection output -> attention out (B, N, H*Dh)."""
    B, N, three_inner = qkv3.shape
    inner = heads * dim_head
    assert three_inner == 3 * inner
    # lane-dense column blocks of width H*Dh require a 128-multiple inner dim
    assert inner % 128 == 0, "heads*dim_head must be a multiple of 128"

    sub_align = 16 if qkv3.dtype == jnp.bfloat16 else 8
    tq = _pick_tile(N, tq_target, sub_align)
    tkv = _pick_tile(N, tkv_target, 128)     # lane dim of s/p, contraction of PV

    # q/k/v are the three consecutive column blocks of the qkv projection;
    # indexing them directly avoids any HBM transpose between the kernels.
    q_spec = pl.BlockSpec((pl.Squeezed(), tq, inner), lambda b, qi, ki: (b, qi, 0))
    k_spec = pl.BlockSpec((pl.Squeezed(), tkv, inner), lambda b, qi, ki: (b, ki, 1))
    v_spec = pl.BlockSpec((pl.Squeezed(), tkv, inner), lambda b, qi, ki: (b, ki, 2))
    o_spec = pl.BlockSpec((pl.Squeezed(), tq, inner), lambda b, qi, ki: (b, qi, 0))

    return pl.pallas_call(
        functools.partial(flash_attn_kernel, heads=heads, dim_head=dim_head),
        out_shape=jax.ShapeDtypeStruct((B, N, inner), qkv3.dtype),
        grid_spec=pltpu.PrefetchScalarGridSpec(
            num_scalar_prefetch=0,
            grid=(B, N // tq, N // tkv),
            in_specs=[q_spec, k_spec, v_spec],
            out_specs=o_spec,
            scratch_shapes=[
                pltpu.VMEM((tq, heads), jnp.float32),   # running max m (per head)
                pltpu.VMEM((tq, heads), jnp.float32),   # running sum l (per head)
                pltpu.VMEM((tq, inner), jnp.float32),   # running acc (lane-dense)
            ],
        ),
        compiler_params=pltpu.CompilerParams(
            dimension_semantics=("parallel", "parallel", "arbitrary"),
            vmem_limit_bytes=_VMEM_LIMIT,
        ),
    )(qkv3, qkv3, qkv3)


# --------------------------------------------------------------------------- #
# full forward (== Attention.forward)
# --------------------------------------------------------------------------- #
def attention_forward(x, w_qkv, w_out, *, heads, dim_head,
                      attn_tq=512, attn_tkv=512,
                      lin_tm=512, lin_tn=512, lin_tk=512):
    """x: (B, N, D); w_qkv: (3*heads*dim_head, D); w_out: (D, heads*dim_head)."""
    B, N, D = x.shape
    inner = heads * dim_head
    scale = dim_head ** (-0.5)

    # Fold the softmax scale into the Q rows of the qkv weight (free at runtime)
    # and cast operands to bf16 for the MXU (all accumulation stays in f32).
    w_qkv_bf = w_qkv.at[:inner].multiply(scale).astype(jnp.bfloat16)
    w_out_bf = w_out.astype(jnp.bfloat16)
    x_bf = x.astype(jnp.bfloat16)

    # qkv projection (tiled Pallas matmul, weight consumed untransposed)
    qkv = pallas_linear(x_bf.reshape(B * N, D), w_qkv_bf,
                        out_dtype=jnp.bfloat16,
                        tm_target=lin_tm, tn_target=lin_tn, tk_target=lin_tk)

    # Free (row-major preserving) reshape only — no HBM transpose.
    qkv3 = qkv.reshape(B, N, 3 * inner)

    # Flash attention; output already in 'b n (h d)' layout (no transpose back).
    out = pallas_flash_attention(qkv3, heads=heads, dim_head=dim_head,
                                 tq_target=attn_tq, tkv_target=attn_tkv)

    # Output projection (project_out=True whenever heads*dim_head != D).
    y = pallas_linear(out.reshape(B * N, inner), w_out_bf,
                      out_dtype=jnp.float32,
                      tm_target=lin_tm, tn_target=lin_tn, tk_target=lin_tk)
    return y.reshape(B, N, D)


# --------------------------------------------------------------------------- #
# pure-JAX reference (f32)
# --------------------------------------------------------------------------- #
def attention_ref(x, w_qkv, w_out, *, heads, dim_head):
    B, N, D = x.shape
    inner = heads * dim_head
    scale = dim_head ** (-0.5)
    qkv = x @ w_qkv.T
    qkv = qkv.reshape(B, N, 3, heads, dim_head)
    q, k, v = (jnp.transpose(qkv[:, :, i], (0, 2, 1, 3)) for i in range(3))
    dots = jnp.einsum("bhnd,bhmd->bhnm", q, k) * scale
    attn = jax.nn.softmax(dots, axis=-1)
    out = jnp.einsum("bhnm,bhmd->bhnd", attn, v)
    out = jnp.transpose(out, (0, 2, 1, 3)).reshape(B, N, inner)
    return out @ w_out.T


if __name__ == "__main__":
    def _run_case(B, N, D, heads, dim_head, *, seed, **kw):
        inner = heads * dim_head
        key = jax.random.PRNGKey(seed)
        kx, kq, ko = jax.random.split(key, 3)
        x = jax.random.normal(kx, (B, N, D), dtype=jnp.float32)
        w_qkv = 0.02 * jax.random.normal(kq, (3 * inner, D), dtype=jnp.float32)
        w_out = 0.02 * jax.random.normal(ko, (D, inner), dtype=jnp.float32)

        y = attention_forward(x, w_qkv, w_out, heads=heads, dim_head=dim_head, **kw)
        y = jax.block_until_ready(y)
        y_ref = attention_ref(x, w_qkv, w_out, heads=heads, dim_head=dim_head)
        assert y.shape == (B, N, D)
        err = jnp.max(jnp.abs(y - y_ref))
        assert jnp.allclose(y, y_ref, atol=2e-2, rtol=5e-2), (
            f"mismatch vs reference (bf16 tolerance): max abs err {err:.3e}")

    # Small shapes consistent with the module (single-block grids).
    _run_case(2, 8, 32, 4, 32, seed=0)
    # Larger case exercising the multi-step online softmax, multi-tile grids
    # and the multi-step K accumulation in the output projection.
    _run_case(2, 256, 64, 8, 64, seed=1,
              attn_tq=128, attn_tkv=128, lin_tk=256)

    print("KERNEL_OK")
</pallas_src>

<mosaic_0001>
module attributes {stable_mosaic.version = 11 : i64} {
  func.func @linear_kernel_acc(%arg0: i32, %arg1: i32, %arg2: i32, %arg3: memref<16x32xbf16, #tpu.memory_space<vmem>>, %arg4: memref<384x32xbf16, #tpu.memory_space<vmem>>, %arg5: memref<16x384xbf16, #tpu.memory_space<vmem>>, %arg6: memref<16x384xf32, #tpu.memory_space<vmem>>) attributes {dimension_semantics = [#tpu.dimension_semantics<parallel>, #tpu.dimension_semantics<parallel>, #tpu.dimension_semantics<arbitrary>], iteration_bounds = array<i64: 1, 1, 1>, scalar_prefetch = 0 : i64, scratch_operands = 1 : i64, tpu.core_type = #tpu.core_type<tc>, window_params = [{transform_indices = @transform_0, window_bounds = array<i64: 16, 32>}, {transform_indices = @transform_1, window_bounds = array<i64: 384, 32>}, {transform_indices = @transform_2, window_bounds = array<i64: 16, 384>}]} {
    %c0_i32 = arith.constant 0 : i32
    %0 = arith.cmpi eq, %arg2, %c0_i32 : i32
    %1 = arith.extui %0 : i1 to i32
    %c0_i32_0 = arith.constant 0 : i32
    %2 = arith.cmpi ne, %1, %c0_i32_0 : i32
    scf.if %2 {
      %cst_10 = arith.constant 0.000000e+00 : f32
      %12 = vector.broadcast %cst_10 : f32 to vector<16x384xf32>
      %c0_11 = arith.constant 0 : index
      %c0_12 = arith.constant 0 : index
      %13 = vector.load %arg6[%c0_11, %c0_12] : memref<16x384xf32, #tpu.memory_space<vmem>>, vector<16x384xf32>
      tpu.vector_store %arg6[%c0_11, %c0_12], %12 {strides = array<i32>} : memref<16x384xf32, #tpu.memory_space<vmem>>, vector<16x384xf32>,
    } else {
    }
    %c0 = arith.constant 0 : index
    %c0_1 = arith.constant 0 : index
    %3 = vector.load %arg6[%c0, %c0_1] : memref<16x384xf32, #tpu.memory_space<vmem>>, vector<16x384xf32>
    %c0_2 = arith.constant 0 : index
    %c0_3 = arith.constant 0 : index
    %4 = vector.load %arg3[%c0_2, %c0_3] : memref<16x32xbf16, #tpu.memory_space<vmem>>, vector<16x32xbf16>
    %c0_4 = arith.constant 0 : index
    %c0_5 = arith.constant 0 : index
    %5 = vector.load %arg4[%c0_4, %c0_5] : memref<384x32xbf16, #tpu.memory_space<vmem>>, vector<384x32xbf16>
    %cst = arith.constant dense<0.000000e+00> : vector<16x384xf32>
    %6 = tpu.matmul %4, %5, %cst {dimension_numbers = #tpu.dot_dimension_numbers<[1], [1], [0], [0], [0, 0, 1, 0], [], []>} : vector<16x32xbf16>, vector<384x32xbf16>, vector<16x384xf32> -> vector<16x384xf32>
    %7 = arith.addf %3, %6 : vector<16x384xf32>
    %c0_6 = arith.constant 0 : index
    %c0_7 = arith.constant 0 : index
    %8 = vector.load %arg6[%c0_6, %c0_7] : memref<16x384xf32, #tpu.memory_space<vmem>>, vector<16x384xf32>
    tpu.vector_store %arg6[%c0_6, %c0_7], %7 {strides = array<i32>} : memref<16x384xf32, #tpu.memory_space<vmem>>, vector<16x384xf32>,
    %c0_i32_8 = arith.constant 0 : i32
    %9 = arith.cmpi eq, %arg2, %c0_i32_8 : i32
    %10 = arith.extui %9 : i1 to i32
    %c0_i32_9 = arith.constant 0 : i32
    %11 = arith.cmpi ne, %10, %c0_i32_9 : i32
    scf.if %11 {
      %c0_10 = arith.constant 0 : index
      %c0_11 = arith.constant 0 : index
      %12 = vector.load %arg6[%c0_10, %c0_11] : memref<16x384xf32, #tpu.memory_space<vmem>>, vector<16x384xf32>
      %13 = arith.truncf %12 : vector<16x384xf32> to vector<16x384xbf16>
      %c0_12 = arith.constant 0 : index
      %c0_13 = arith.constant 0 : index
      %14 = vector.load %arg5[%c0_12, %c0_13] : memref<16x384xbf16, #tpu.memory_space<vmem>>, vector<16x384xbf16>
      tpu.vector_store %arg5[%c0_12, %c0_13], %13 {strides = array<i32>} : memref<16x384xbf16, #tpu.memory_space<vmem>>, vector<16x384xbf16>,
    } else {
    }
    return
  }
  func.func @transform_0(%arg0: i32, %arg1: i32, %arg2: i32) -> (i32, i32) {
    %c0_i32 = arith.constant 0 : i32
    return %arg0, %arg2 : i32, i32
  }
  func.func @transform_1(%arg0: i32, %arg1: i32, %arg2: i32) -> (i32, i32) {
    %c0_i32 = arith.constant 0 : i32
    return %arg1, %arg2 : i32, i32
  }
  func.func @transform_2(%arg0: i32, %arg1: i32, %arg2: i32) -> (i32, i32) {
    %c0_i32 = arith.constant 0 : i32
    return %arg0, %arg1 : i32, i32
  }
}

</mosaic_0001>

<llo_original>
// kernel: tpu_custom_call.1
$region0: #{tpu_custom_call.1}
  #allocation0 [shape = 'u32[]', space=smem, size = 0x4, offset = 0x4, fixed_abs, tag = 'smem constant byte address 0x4 - core index']
  #allocation1 [shape = 'u32[144,128]{1,0:T(1,128)}', space=vmem, size = 0x12000, scoped, tag = 'internal scratch']
  #allocation2 [shape = 'f32[16,384]{1,0:T(8,128)}', space=vmem, size = 0x6000, scoped, tag = 'scratch operand']
  %s0 = inlined_call_operand.vmem [shape: bf16[16,32], index: 0, kind: input, shape index: {}]
  %s1 = inlined_call_operand.vmem [shape: bf16[384,32], index: 1, kind: input, shape index: {}]
  %s2 = inlined_call_operand.hbm [shape: bf16[16,384], index: 2, kind: output, shape index: {}]
  %s3 = sld [smem:[#allocation0]]
  $region26: #{tpu_custom_call.1} parent=0
    _
  %s5 = ssub.s32 1, %s3
  %s6 = scalar_select 0, %s5, %s3
  $region1: #{tpu_custom_call.1} parent=0
    #allocation3 [shape = 'u8[12288]{0}', space=vmem, size = 0x3000, scoped, tag = 'output window, operand 0, single buffered']
    #allocation4 [shape = 's32[1]{0}', space=sflag, size = 0x4, scoped, tag = 'scoped memory for tpu_custom_call.1']
    %7 = vsyncpa [#allocation4], 0
    // Predicated region
    $region2: #{tpu_custom_call.1} parent=1 // pred_check
      _
    $region3: #{tpu_custom_call.1} parent=1 // pred_check_branch
      %9 = sbr.rel (0) target = $region5
    $region4: #{tpu_custom_call.1} parent=1 // pred_region
      _
    $region5: #{tpu_custom_call.1} parent=1 // pred_fallthru
      _
    // Predicated region
    $region6: #{tpu_custom_call.1} parent=1 // pred_check
      _
    $region7: #{tpu_custom_call.1} parent=1 // pred_check_branch
      %11 = sbr.rel (0) target = $region9
    $region8: #{tpu_custom_call.1} parent=1 // pred_region
      _
    $region9: #{tpu_custom_call.1} parent=1 // pred_fallthru
      _
    %p13 = scmp.eq.s32.totalorder 0, 0
    // Predicated region
    $region10: #{tpu_custom_call.1} parent=1 // pred_check
      %p14 = pneg %p13
    $region11: #{tpu_custom_call.1} parent=1 // pred_check_branch
      %16 = sbr.rel (%p14) target = $region13
    $region12: #{tpu_custom_call.1} parent=1 // pred_region
      %17 = vst [vmem:[#allocation2] sm:$0xff] 0.0
      %18 = vst [vmem:[#allocation2 + $0x8] sm:$0xff] 0.0
      %19 = vst [vmem:[#allocation2 + $0x10] sm:$0xff] 0.0
      %20 = vst [vmem:[#allocation2 + $0x18] sm:$0xff] 0.0
      %21 = vst [vmem:[#allocation2 + $0x20] sm:$0xff] 0.0
      %22 = vst [vmem:[#allocation2 + $0x28] sm:$0xff] 0.0
    $region13: #{tpu_custom_call.1} parent=1 // pred_fallthru
      _
    %v23 = vld [vmem:[#allocation2] sm:$0xff]
    %v24 = vld [vmem:[#allocation2 + $0x8] sm:$0xff]
    %v25 = vld [vmem:[#allocation2 + $0x10] sm:$0xff]
    %v26 = vld [vmem:[#allocation2 + $0x18] sm:$0xff]
    %v27 = vld [vmem:[#allocation2 + $0x20] sm:$0xff]
    %v28 = vld [vmem:[#allocation2 + $0x28] sm:$0xff]
    %v29 = vld [vmem:[%s0] sm:$0xf]
    %v30 = vld [vmem:[%s0 + $0x4] sm:$0xf]
    %v31 = vld [vmem:[%s1] sm:$0xf]
    %v32 = vld [vmem:[%s1 + $0x4] sm:$0xf]
    %v33 = vld [vmem:[%s1 + $0x8] sm:$0xf]
    %v34 = vld [vmem:[%s1 + $0xc] sm:$0xf]
    %v35 = vld [vmem:[%s1 + $0x10] sm:$0xf]
    %v36 = vld [vmem:[%s1 + $0x14] sm:$0xf]
    %v37 = vld [vmem:[%s1 + $0x18] sm:$0xf]
    %v38 = vld [vmem:[%s1 + $0x1c] sm:$0xf]
    %v39 = vld [vmem:[%s1 + $0x20] sm:$0xf]
    %v40 = vld [vmem:[%s1 + $0x24] sm:$0xf]
    %v41 = vld [vmem:[%s1 + $0x28] sm:$0xf]
    %v42 = vld [vmem:[%s1 + $0x2c] sm:$0xf]
    %v43 = vld [vmem:[%s1 + $0x30] sm:$0xf]
    %v44 = vld [vmem:[%s1 + $0x34] sm:$0xf]
    %v45 = vld [vmem:[%s1 + $0x38] sm:$0xf]
    %v46 = vld [vmem:[%s1 + $0x3c] sm:$0xf]
    %v47 = vld [vmem:[%s1 + $0x40] sm:$0xf]
    %v48 = vld [vmem:[%s1 + $0x44] sm:$0xf]
    %v49 = vld [vmem:[%s1 + $0x48] sm:$0xf]
    %v50 = vld [vmem:[%s1 + $0x4c] sm:$0xf]
    %v51 = vld [vmem:[%s1 + $0x50] sm:$0xf]
    %v52 = vld [vmem:[%s1 + $0x54] sm:$0xf]
    %v53 = vld [vmem:[%s1 + $0x58] sm:$0xf]
    %v54 = vld [vmem:[%s1 + $0x5c] sm:$0xf]
    %v55 = vld [vmem:[%s1 + $0x60] sm:$0xf]
    %v56 = vld [vmem:[%s1 + $0x64] sm:$0xf]
    %v57 = vld [vmem:[%s1 + $0x68] sm:$0xf]
    %v58 = vld [vmem:[%s1 + $0x6c] sm:$0xf]
    %v59 = vld [vmem:[%s1 + $0x70] sm:$0xf]
    %v60 = vld [vmem:[%s1 + $0x74] sm:$0xf]
    %v61 = vld [vmem:[%s1 + $0x78] sm:$0xf]
    %v62 = vld [vmem:[%s1 + $0x7c] sm:$0xf]
    %v63 = vld [vmem:[%s1 + $0x80] sm:$0xf]
    %v64 = vld [vmem:[%s1 + $0x84] sm:$0xf]
    %v65 = vld [vmem:[%s1 + $0x88] sm:$0xf]
    %v66 = vld [vmem:[%s1 + $0x8c] sm:$0xf]
    %v67 = vld [vmem:[%s1 + $0x90] sm:$0xf]
    %v68 = vld [vmem:[%s1 + $0x94] sm:$0xf]
    %v69 = vld [vmem:[%s1 + $0x98] sm:$0xf]
    %v70 = vld [vmem:[%s1 + $0x9c] sm:$0xf]
    %v71 = vld [vmem:[%s1 + $0xa0] sm:$0xf]
    %v72 = vld [vmem:[%s1 + $0xa4] sm:$0xf]
    %v73 = vld [vmem:[%s1 + $0xa8] sm:$0xf]
    %v74 = vld [vmem:[%s1 + $0xac] sm:$0xf]
    %v75 = vld [vmem:[%s1 + $0xb0] sm:$0xf]
    %v76 = vld [vmem:[%s1 + $0xb4] sm:$0xf]
    %v77 = vld [vmem:[%s1 + $0xb8] sm:$0xf]
    %v78 = vld [vmem:[%s1 + $0xbc] sm:$0xf]
    %v81 = vunpack.c.l.b16 %v29
    %v82 = vunpack.c.l.b16 %v30
    %v83 = vpack.c.b16 %v82, %v81
    %v132 = vunpack.c.l.b16 %v31
    %v133 = vunpack.c.l.b16 %v32
    %v134 = vunpack.c.l.b16 %v33
    %v135 = vunpack.c.l.b16 %v34
    %v136 = vunpack.c.l.b16 %v35
    %v137 = vunpack.c.l.b16 %v36
    %v138 = vunpack.c.l.b16 %v37
    %v139 = vunpack.c.l.b16 %v38
    %v140 = vunpack.c.l.b16 %v39
    %v141 = vunpack.c.l.b16 %v40
    %v142 = vunpack.c.l.b16 %v41
    %v143 = vunpack.c.l.b16 %v42
    %v144 = vunpack.c.l.b16 %v43
    %v145 = vunpack.c.l.b16 %v44
    %v146 = vunpack.c.l.b16 %v45
    %v147 = vunpack.c.l.b16 %v46
    %v148 = vunpack.c.l.b16 %v47
    %v149 = vunpack.c.l.b16 %v48
    %v150 = vunpack.c.l.b16 %v49
    %v151 = vunpack.c.l.b16 %v50
    %v152 = vunpack.c.l.b16 %v51
    %v153 = vunpack.c.l.b16 %v52
    %v154 = vunpack.c.l.b16 %v53
    %v155 = vunpack.c.l.b16 %v54
    %v156 = vunpack.c.l.b16 %v55
    %v157 = vunpack.c.l.b16 %v56
    %v158 = vunpack.c.l.b16 %v57
    %v159 = vunpack.c.l.b16 %v58
    %v160 = vunpack.c.l.b16 %v59
    %v161 = vunpack.c.l.b16 %v60
    %v162 = vunpack.c.l.b16 %v61
    %v163 = vunpack.c.l.b16 %v62
    %v164 = vunpack.c.l.b16 %v63
    %v165 = vunpack.c.l.b16 %v64
    %v166 = vunpack.c.l.b16 %v65
    %v167 = vunpack.c.l.b16 %v66
    %v168 = vunpack.c.l.b16 %v67
    %v169 = vunpack.c.l.b16 %v68
    %v170 = vunpack.c.l.b16 %v69
    %v171 = vunpack.c.l.b16 %v70
    %v172 = vunpack.c.l.b16 %v71
    %v173 = vunpack.c.l.b16 %v72
    %v174 = vunpack.c.l.b16 %v73
    %v175 = vunpack.c.l.b16 %v74
    %v176 = vunpack.c.l.b16 %v75
    %v177 = vunpack.c.l.b16 %v76
    %v178 = vunpack.c.l.b16 %v77
    %v179 = vunpack.c.l.b16 %v78
    %v180 = vpack.c.b16 %v133, %v132
    %v181 = vpack.c.b16 %v135, %v134
    %v182 = vpack.c.b16 %v137, %v136
    %v183 = vpack.c.b16 %v139, %v138
    %v184 = vpack.c.b16 %v141, %v140
    %v185 = vpack.c.b16 %v143, %v142
    %v186 = vpack.c.b16 %v145, %v144
    %v187 = vpack.c.b16 %v147, %v146
    %v188 = vpack.c.b16 %v149, %v148
    %v189 = vpack.c.b16 %v151, %v150
    %v190 = vpack.c.b16 %v153, %v152
    %v191 = vpack.c.b16 %v155, %v154
    %v192 = vpack.c.b16 %v157, %v156
    %v193 = vpack.c.b16 %v159, %v158
    %v194 = vpack.c.b16 %v161, %v160
    %v195 = vpack.c.b16 %v163, %v162
    %v196 = vpack.c.b16 %v165, %v164
    %v197 = vpack.c.b16 %v167, %v166
    %v198 = vpack.c.b16 %v169, %v168
    %v199 = vpack.c.b16 %v171, %v170
    %v200 = vpack.c.b16 %v173, %v172
    %v201 = vpack.c.b16 %v175, %v174
    %v202 = vpack.c.b16 %v177, %v176
    %v203 = vpack.c.b16 %v179, %v178
    %vm204 = vcmask 261120
    %v206 = vsel %vm204, %v83, 0
    %v209 = vsel %vm204, %v180, 0
    %v212 = vsel %vm204, %v181, 0
    %v215 = vsel %vm204, %v182, 0
    %v218 = vsel %vm204, %v183, 0
    %v221 = vsel %vm204, %v184, 0
    %v224 = vsel %vm204, %v185, 0
    %v227 = vsel %vm204, %v186, 0
    %v230 = vsel %vm204, %v187, 0
    %v233 = vsel %vm204, %v188, 0
    %v236 = vsel %vm204, %v189, 0
    %v239 = vsel %vm204, %v190, 0
    %v242 = vsel %vm204, %v191, 0
    %v245 = vsel %vm204, %v192, 0
    %v248 = vsel %vm204, %v193, 0
    %v251 = vsel %vm204, %v194, 0
    %v254 = vsel %vm204, %v195, 0
    %v257 = vsel %vm204, %v196, 0
    %v260 = vsel %vm204, %v197, 0
    %v263 = vsel %vm204, %v198, 0
    %v266 = vsel %vm204, %v199, 0
    %v269 = vsel %vm204, %v200, 0
    %v272 = vsel %vm204, %v201, 0
    %v275 = vsel %vm204, %v202, 0
    %v278 = vsel %vm204, %v203, 0
    %280 = vmatprep.subr.bf16.mxu0 0
    %281 = vmatpush1.bf16.xpose.msra.mxu0 %v209
    %282 = vmatprep.subr.bf16.mxu0 0
    %283 = vmatpush1.bf16.xpose.msra.mxu0 %v212
    %284 = vmatprep.subr.bf16.mxu0 0
    %285 = vmatpush1.bf16.xpose.msra.mxu0 %v215
    %286 = vmatprep.subr.bf16.mxu0 0
    %287 = vmatpush1.bf16.xpose.msra.mxu0 %v218
    %288 = vmatprep.subr.bf16.mxu0 0
    %289 = vmatpush1.bf16.xpose.msra.mxu0 %v221
    %290 = vmatprep.subr.bf16.mxu0 0
    %291 = vmatpush1.bf16.xpose.msra.mxu0 %v224
    %292 = vmatprep.subr.bf16.mxu0 0
    %293 = vmatpush1.bf16.xpose.msra.mxu0 %v227
    %294 = vmatprep.subr.bf16.mxu0 0
    %295 = vmatpush1.bf16.xpose.msra.mxu0 %v230
    %296 = vmatprep.subr.bf16.mxu0 0
    %297 = vmatpush1.bf16.xpose.msra.mxu0 %v233
    %298 = vmatprep.subr.bf16.mxu0 0
    %299 = vmatpush1.bf16.xpose.msra.mxu0 %v236
    %300 = vmatprep.subr.bf16.mxu0 0
    %301 = vmatpush1.bf16.xpose.msra.mxu0 %v239
    %302 = vmatprep.subr.bf16.mxu0 0
    %303 = vmatpush1.bf16.xpose.msra.mxu0 %v242
    %304 = vmatprep.subr.bf16.mxu0 0
    %305 = vmatpush1.bf16.xpose.msra.mxu0 %v245
    %306 = vmatprep.subr.bf16.mxu0 0
    %307 = vmatpush1.bf16.xpose.msra.mxu0 %v248
    %308 = vmatprep.subr.bf16.mxu0 0
    %309 = vmatpush1.bf16.xpose.msra.mxu0 %v251
    %310 = vmatprep.subr.bf16.mxu0 0
    %311 = vmatpush1.bf16.xpose.msra.mxu0 %v254
    %312 = vmatprep.mubr.bf16.mxu0 0
    %313 = vmatmul.mubr.bf16.gmra.mrb[0].mxu0 %v206
    %v314 = vpop.f32.mrb[0].mxu0
    %v315 = vadd.f32 0.0, %v314
    %v316 = vpop.f32.mrb[0].mxu0
    %v317 = vadd.f32 0.0, %v316
    %v318 = vpop.f32.mrb[0].mxu0
    %v319 = vadd.f32 0.0, %v318
    %v320 = vpop.f32.mrb[0].mxu0
    %v321 = vadd.f32 0.0, %v320
    %322 = vdwg.mxu0
    %323 = vmatprep.subr.bf16.mxu0 0
    %324 = vmatpush1.bf16.xpose.msra.mxu0 %v257
    %325 = vmatprep.subr.bf16.mxu0 0
    %326 = vmatpush1.bf16.xpose.msra.mxu0 %v260
    %327 = vmatprep.subr.bf16.mxu0 0
    %328 = vmatpush1.bf16.xpose.msra.mxu0 %v263
    %329 = vmatprep.subr.bf16.mxu0 0
    %330 = vmatpush1.bf16.xpose.msra.mxu0 %v266
    %331 = vmatprep.subr.bf16.mxu0 0
    %332 = vmatpush1.bf16.xpose.msra.mxu0 %v269
    %333 = vmatprep.subr.bf16.mxu0 0
    %334 = vmatpush1.bf16.xpose.msra.mxu0 %v272
    %335 = vmatprep.subr.bf16.mxu0 0
    %336 = vmatpush1.bf16.xpose.msra.mxu0 %v275
    %337 = vmatprep.subr.bf16.mxu0 0
    %338 = vmatpush1.bf16.xpose.msra.mxu0 %v278
    %339 = vmatprep.subr.bf16.mxu0 0
    %340 = vmatpush1.bf16.xpose.msra.mxu0 0
    %341 = vmatprep.subr.bf16.mxu0 0
    %342 = vmatpush1.bf16.xpose.msra.mxu0 0
    %343 = vmatprep.subr.bf16.mxu0 0
    %344 = vmatpush1.bf16.xpose.msra.mxu0 0
    %345 = vmatprep.subr.bf16.mxu0 0
    %346 = vmatpush1.bf16.xpose.msra.mxu0 0
    %347 = vmatprep.subr.bf16.mxu0 0
    %348 = vmatpush1.bf16.xpose.msra.mxu0 0
    %349 = vmatprep.subr.bf16.mxu0 0
    %350 = vmatpush1.bf16.xpose.msra.mxu0 0
    %351 = vmatprep.subr.bf16.mxu0 0
    %352 = vmatpush1.bf16.xpose.msra.mxu0 0
    %353 = vmatprep.subr.bf16.mxu0 0
    %354 = vmatpush1.bf16.xpose.msra.mxu0 0
    %355 = vmatprep.mubr.bf16.mxu0 0
    %356 = vmatmul.mubr.bf16.gmra.mrb[0].mxu0 %v206
    %v357 = vpop.f32.mrb[0].mxu0
    %v358 = vadd.f32 0.0, %v357
    %v359 = vpop.f32.mrb[0].mxu0
    %v360 = vpop.f32.mrb[0].mxu0
    %v361 = vadd.f32 0.0, %v360
    %v362 = vpop.f32.mrb[0].mxu0
    %363 = vdwg.mxu0
    %v364 = vadd.f32 %v23, %v315
    %v365 = vadd.f32 %v24, %v317
    %v366 = vadd.f32 %v25, %v358
    %v367 = vadd.f32 %v26, %v319
    %v368 = vadd.f32 %v27, %v321
    %v369 = vadd.f32 %v28, %v361
    %370 = vst [vmem:[#allocation2] sm:$0xff] %v364
    %371 = vst [vmem:[#allocation2 + $0x8] sm:$0xff] %v365
    %372 = vst [vmem:[#allocation2 + $0x10] sm:$0xff] %v366
    %373 = vst [vmem:[#allocation2 + $0x18] sm:$0xff] %v367
    %374 = vst [vmem:[#allocation2 + $0x20] sm:$0xff] %v368
    %375 = vst [vmem:[#allocation2 + $0x28] sm:$0xff] %v369
    // Predicated region
    $region14: #{tpu_custom_call.1} parent=1 // pred_check
      %p376 = pneg %p13
    $region15: #{tpu_custom_call.1} parent=1 // pred_check_branch
      %378 = sbr.rel (%p376) target = $region17
    $region16: #{tpu_custom_call.1} parent=1 // pred_region
      %v379 = vld [vmem:[#allocation2] sm:$0xff]
      %v380 = vld [vmem:[#allocation2 + $0x8] sm:$0xff]
      %v381 = vld [vmem:[#allocation2 + $0x10] sm:$0xff]
      %v382 = vld [vmem:[#allocation2 + $0x18] sm:$0xff]
      %v383 = vld [vmem:[#allocation2 + $0x20] sm:$0xff]
      %v384 = vld [vmem:[#allocation2 + $0x28] sm:$0xff]
      %v385 = vpack.c.bf16 %v382, %v379
      %v386 = vpack.c.bf16 %v383, %v380
      %v387 = vpack.c.bf16 %v384, %v381
      %v391 = vunpack.c.l.b16 %v385
      %v392 = vunpack.c.l.b16 %v386
      %v393 = vunpack.c.l.b16 %v387
      %v394 = vunpack.c.h.b16 %v385
      %v395 = vunpack.c.h.b16 %v386
      %v396 = vunpack.c.h.b16 %v387
      %v397 = vpack.c.b16 %v392, %v391
      %v398 = vpack.c.b16 %v393, %v393
      %v399 = vpack.c.b16 %v395, %v394
      %v400 = vpack.c.b16 %v396, %v396
      %405 = vst [vmem:[#allocation3] sm:$0xff] %v397
      %406 = vst [vmem:[#allocation3 + $0x8] sm:$0xf] %v398
      %407 = vst [vmem:[#allocation3 + $0xc] sm:$0xff] %v399
      %408 = vst [vmem:[#allocation3 + $0x14] sm:$0xf] %v400
    $region17: #{tpu_custom_call.1} parent=1 // pred_fallthru
      _
    // Predicated region
    $region18: #{tpu_custom_call.1} parent=1 // pred_check
      _
    $region19: #{tpu_custom_call.1} parent=1 // pred_check_branch
      %410 = sbr.rel (0) target = $region21
    $region20: #{tpu_custom_call.1} parent=1 // pred_region
      %s412 = ssub.s32 384, 384
      %413 = vsyncadd [#allocation4], %s412
      %s414 = sshll.u32 [#allocation3], 4
      %s415 = int_to_ptr.vmem [resolvable:$true] %s414
      %420 = dma.vmem_to_hbm [thread:$0]  %s415, 384, %s2, [#allocation4], 192, 192, 12
    $region21: #{tpu_custom_call.1} parent=1 // pred_fallthru
      _
    // Predicated region
    $region22: #{tpu_custom_call.1} parent=1 // pred_check
      _
    $region23: #{tpu_custom_call.1} parent=1 // pred_check_branch
      %422 = sbr.rel (0) target = $region25
    $region24: #{tpu_custom_call.1} parent=1 // pred_region
      %423 = dma.done [#allocation4], 384
    $region25: #{tpu_custom_call.1} parent=1 // pred_fallthru
      _
    %424 = vsyncpa [#allocation4], 1

</llo_original>
